<compile_context>
chip_gen: v7x
topology: tpu7x:2x2x1
jax: 0.10.0
libtpu: 0.0.40
codegen_flags: <defaults>
</compile_context>

<pallas_src>
import functools

import jax
import jax.numpy as jnp
from jax.experimental import pallas as pl
from jax.experimental.pallas import tpu as pltpu

_NEG_BIG = -1e30          # finite "-inf" so (m_prev - m_new) never gives NaN
_TILE = 128               # attention row/col tile (tq = tk)
_VMEM_LIMIT = 32 * 1024 * 1024   # safe headroom on v5e/v6e/v7x


# ---------------------------------------------------------------------------
# activations (mirror GnnNet.act_map)
# ---------------------------------------------------------------------------
def _act_fn(name):
    if name == "linear":
        return lambda x: x
    if name == "elu":
        return lambda x: jnp.where(x > 0, x, jnp.exp(x) - 1.0)
    if name == "sigmoid":
        return lambda x: 1.0 / (1.0 + jnp.exp(-x))
    if name == "tanh":
        return jnp.tanh
    if name == "relu":
        return lambda x: jnp.maximum(x, 0.0)
    if name == "relu6":
        return lambda x: jnp.clip(x, 0.0, 6.0)
    if name == "softplus":
        # numerically stable: max(x,0) + log1p(exp(-|x|))
        return lambda x: jnp.maximum(x, 0.0) + jnp.log1p(jnp.exp(-jnp.abs(x)))
    if name == "leaky_relu":
        return lambda x: jnp.where(x > 0, x, 0.01 * x)
    raise Exception("wrong activate function:", str(name))


# ---------------------------------------------------------------------------
# Kernel 1: per-row-tile projection + attention-logit precompute (f32 MXU)
# ---------------------------------------------------------------------------
def _proj_kernel(x_ref, w_ref, albd_ref, arbd_ref, h_ref, sl_ref, srT_ref):
    """h = x @ W; sl = h @ AL_blockdiag; srT = (h @ AR_blockdiag)^T."""
    x = x_ref[...]                                                       # f32
    h = jnp.dot(x, w_ref[...], preferred_element_type=jnp.float32)      # [tm, H*C]
    h_ref[...] = h
    # block-diagonal attention vectors -> one small matmul per side
    # (replaces 2*H narrow XLU lane reductions per head).
    sl_ref[...] = jnp.dot(h, albd_ref[...], preferred_element_type=jnp.float32)
    sr = jnp.dot(h, arbd_ref[...], preferred_element_type=jnp.float32)  # [tm, H]
    # source term transposed ONCE per row tile (amortized over all qi tiles)
    srT_ref[...] = jnp.swapaxes(sr, 0, 1)                               # [H, tm]


# ---------------------------------------------------------------------------
# Kernel 2: block-sparse flash-style masked softmax + neighbour aggregation
# ---------------------------------------------------------------------------
def _gat_attn_kernel(cols_ref, cnts_ref,                    # scalar prefetch
                     adj_ref, sl_ref, srT_ref, h_ref, b_ref,
                     o_ref, m_sc, l_sc, acc_sc,
                     *, heads, out_ch, concat, act, neg_slope=0.2):
    qi = pl.program_id(0)
    ki = pl.program_id(1)
    neg_big = jnp.float32(_NEG_BIG)

    @pl.when(ki == 0)
    def _():
        m_sc[...] = jnp.full_like(m_sc, neg_big)
        l_sc[...] = jnp.zeros_like(l_sc)
        acc_sc[...] = jnp.zeros_like(acc_sc)

    # only visit tiles that actually contain edges (ragged count per row tile)
    @pl.when(ki < cnts_ref[qi])
    def _():
        # additive mask bias computed ONCE per (qi, ki) tile, directly on int8
        mask_bias = jnp.where(adj_ref[...] > 0, jnp.float32(0.0), neg_big)
        sl = sl_ref[...]                                    # [tq, H]   f32
        srT = srT_ref[...]                                  # [H, tk]   f32
        hh = h_ref[...]                                     # [tk, H*C] f32

        for hd in range(heads):                             # static unroll
            c0, c1 = hd * out_ch, (hd + 1) * out_ch
            # GAT logits: e[i,j] = leaky_relu(a_l.h_i + a_r.h_j) + mask_bias
            s = sl[:, hd:hd + 1] + srT[hd:hd + 1, :]        # [tq, tk]
            e = jnp.maximum(s, neg_slope * s) + mask_bias   # leaky_relu + mask

            # online (flash) softmax update for this head; masked entries give
            # exp(-1e30 - m_new) == 0 on any row with >= 1 edge (self loops
            # guarantee that for real rows; padded rows are sliced off later).
            m_hd = m_sc[:, hd:hd + 1]
            m_new = jnp.maximum(m_hd, jnp.max(e, axis=-1, keepdims=True))
            corr = jnp.exp(m_hd - m_new)                    # rescale old stats
            p = jnp.exp(e - m_new)                          # [tq, tk] f32
            l_sc[:, hd:hd + 1] = (corr * l_sc[:, hd:hd + 1]
                                  + jnp.sum(p, axis=-1, keepdims=True))
            acc_sc[:, c0:c1] = (corr * acc_sc[:, c0:c1]
                                + jnp.dot(p, hh[:, c0:c1],
                                          preferred_element_type=jnp.float32))
            m_sc[:, hd:hd + 1] = m_new
        # TODO(synk): heads could be fused into one block-diagonal matmul and
        # the ki tile widened to 256/512 with a strip-mined inner loop once
        # the VPU work is the binding slot again.

    @pl.when(ki == pl.num_programs(1) - 1)
    def _():
        # clamp denom: zero-in-degree (padded) rows would give 0 * inf -> NaN
        inv_l = 1.0 / jnp.maximum(l_sc[...], jnp.float32(1e-20))   # [tq, H]
        acc = acc_sc[...]
        parts = [acc[:, hd * out_ch:(hd + 1) * out_ch] * inv_l[:, hd:hd + 1]
                 for hd in range(heads)]
        if concat:
            out = jnp.concatenate(parts, axis=-1)           # [tq, H*C]
        else:
            out = parts[0]
            for part in parts[1:]:
                out = out + part
            out = out * jnp.float32(1.0 / heads)            # [tq, C]
        # single full-slab store of the output tile
        o_ref[...] = act(out + b_ref[...])


# ---------------------------------------------------------------------------
# Plain-JAX wrapper for one GAT layer (projection kernel + attention kernel)
# ---------------------------------------------------------------------------
def gat_layer(x, adj, col_ids, counts, w, albd, arbd, b, *, heads, out_ch,
              concat, act_name, tile=_TILE):
    n_pad, fin = x.shape
    hc = heads * out_ch
    out_dim = hc if concat else out_ch
    assert n_pad % tile == 0
    n_blk = n_pad // tile
    max_nnz = col_ids.shape[1]
    nnz_blocks = int(jnp.sum(counts))

    # ---- pass 1: projection + per-head attention logits (large row tile) ---
    tile_p = tile
    for cand in (1024, 512, 256):
        if n_pad % cand == 0:
            tile_p = cand
            break

    h, sl, srT = pl.pallas_call(
        _proj_kernel,
        grid=(n_pad // tile_p,),
        in_specs=[pl.BlockSpec((tile_p, fin), lambda i: (i, 0)),
                  pl.BlockSpec((fin, hc), lambda i: (0, 0)),
                  pl.BlockSpec((hc, heads), lambda i: (0, 0)),
                  pl.BlockSpec((hc, heads), lambda i: (0, 0))],
        out_specs=[pl.BlockSpec((tile_p, hc), lambda i: (i, 0)),
                   pl.BlockSpec((tile_p, heads), lambda i: (i, 0)),
                   pl.BlockSpec((heads, tile_p), lambda i: (0, i))],
        out_shape=[jax.ShapeDtypeStruct((n_pad, hc), jnp.float32),
                   jax.ShapeDtypeStruct((n_pad, heads), jnp.float32),
                   jax.ShapeDtypeStruct((heads, n_pad), jnp.float32)],
        compiler_params=pltpu.CompilerParams(
            dimension_semantics=("parallel",),
            vmem_limit_bytes=_VMEM_LIMIT),
        cost_estimate=pl.CostEstimate(
            flops=int(2 * n_pad * fin * hc + 4 * n_pad * hc * heads),
            transcendentals=0,
            bytes_accessed=int(n_pad * fin * 4 + fin * hc * 4
                               + n_pad * hc * 4 + n_pad * heads * 8)),
    )(x, w, albd, arbd)

    # ---- pass 2: block-sparse flash-style masked softmax + 'sum' agg -------
    kernel = functools.partial(_gat_attn_kernel, heads=heads, out_ch=out_ch,
                               concat=concat, act=_act_fn(act_name))
    grid_spec = pltpu.PrefetchScalarGridSpec(
        num_scalar_prefetch=2,
        grid=(n_blk, max_nnz),
        in_specs=[
            # adjacency tile (int8), data-dependent column tile
            pl.BlockSpec((tile, tile),
                         lambda qi, ki, cols, cnts: (qi, cols[qi, ki])),
            pl.BlockSpec((tile, heads),
                         lambda qi, ki, cols, cnts: (qi, 0)),        # sl
            pl.BlockSpec((heads, tile),
                         lambda qi, ki, cols, cnts: (0, cols[qi, ki])),  # sr^T
            pl.BlockSpec((tile, hc),
                         lambda qi, ki, cols, cnts: (cols[qi, ki], 0)),  # h
            pl.BlockSpec((1, out_dim),
                         lambda qi, ki, cols, cnts: (0, 0)),         # bias
        ],
        out_specs=pl.BlockSpec((tile, out_dim),
                               lambda qi, ki, cols, cnts: (qi, 0)),
        scratch_shapes=[pltpu.VMEM((tile, heads), jnp.float32),   # running max
                        pltpu.VMEM((tile, heads), jnp.float32),   # running sum
                        pltpu.VMEM((tile, hc), jnp.float32)])     # weighted acc

    out = pl.pallas_call(
        kernel,
        grid_spec=grid_spec,
        out_shape=jax.ShapeDtypeStruct((n_pad, out_dim), jnp.float32),
        compiler_params=pltpu.CompilerParams(
            dimension_semantics=("parallel", "arbitrary"),
            vmem_limit_bytes=_VMEM_LIMIT),
        cost_estimate=pl.CostEstimate(
            flops=int(nnz_blocks * heads * (2 * tile * tile * out_ch
                                            + 8 * tile * tile)),
            transcendentals=int(nnz_blocks * heads * tile * tile),
            bytes_accessed=int(nnz_blocks * (tile * tile
                                             + tile * hc * 4
                                             + tile * heads * 8)
                               + n_pad * out_dim * 4)),
    )(col_ids, counts, adj, sl, srT, h, b)
    return out


# ---------------------------------------------------------------------------
# GnnNet equivalent (parameter setup + layer loop is plain-JAX glue)
# ---------------------------------------------------------------------------
class GnnNetPallas:
    def __init__(self, architecture, num_feat, layer_num,
                 one_layer_component_num, dropout=0.6):
        self.architecture = architecture
        self.num_feat = num_feat
        self.layer_num = layer_num
        self.one_layer_component_num = one_layer_component_num
        self.dropout = dropout   # eval mode -> identity in forward

    def build_architecture(self, key):
        self.layers = []
        out_channels = None
        head_num = None
        for i in range(self.layer_num):
            if i == 0:
                in_channels = self.num_feat
            else:
                in_channels = out_channels * head_num
            base = i * self.one_layer_component_num
            attention_type = self.architecture[base + 0]
            aggregator_type = self.architecture[base + 1]
            act = self.architecture[base + 2]
            head_num = self.architecture[base + 3]
            out_channels = self.architecture[base + 4]
            concat = True
            if i == self.layer_num - 1 or self.layer_num == 1:
                concat = False

            # TODO(synk): only the 'gat' attention + 'sum' aggregator variant of
            # MessagePassingNet is implemented; other att/agg types not covered.
            assert attention_type == "gat" and aggregator_type == "sum"

            key, kw, ka, kr = jax.random.split(key, 4)
            glorot_w = (6.0 / (in_channels + head_num * out_channels)) ** 0.5
            glorot_a = (6.0 / (out_channels + 1)) ** 0.5
            w = jax.random.uniform(kw, (in_channels, head_num * out_channels),
                                   jnp.float32, -glorot_w, glorot_w)
            al = jax.random.uniform(ka, (head_num, out_channels),
                                    jnp.float32, -glorot_a, glorot_a)
            ar = jax.random.uniform(kr, (head_num, out_channels),
                                    jnp.float32, -glorot_a, glorot_a)

            def block_diag(a):   # [H, C] -> block-diagonal [H*C, H]
                h_, c_ = a.shape
                bd = jnp.zeros((h_ * c_, h_), jnp.float32)
                for k in range(h_):
                    bd = bd.at[k * c_:(k + 1) * c_, k].set(a[k])
                return bd

            out_dim = head_num * out_channels if concat else out_channels
            b = jnp.zeros((1, out_dim), jnp.float32)
            self.layers.append(dict(
                w=w, albd=block_diag(al), arbd=block_diag(ar),   # f32 operands
                b=b, heads=head_num, out_ch=out_channels,
                concat=concat, act=act))

    def forward(self, x, edge_index_all):
        n = x.shape[0]
        n_pad = ((n + _TILE - 1) // _TILE) * _TILE

        # glue: densify sparse edge_index [2, E] into an int8 adjacency mask.
        # adj[i, j] = 1 iff node j sends a message to node i (row = target).
        src, dst = edge_index_all[0], edge_index_all[1]
        adj = jnp.zeros((n_pad, n_pad), jnp.int8)
        adj = adj.at[dst, src].set(1)
        ids = jnp.arange(n, dtype=jnp.int32)
        adj = adj.at[ids, ids].set(1)            # self loops (real nodes only)

        # block-sparsity metadata shared by all layers (scalar prefetch inputs):
        # for every 128-row tile, the sorted list of non-empty 128-col tiles.
        n_blk = n_pad // _TILE
        blk_nnz = (adj.reshape(n_blk, _TILE, n_blk, _TILE)
                   .astype(jnp.int32).sum(axis=(1, 3)) > 0)         # [nb, nb]
        counts = blk_nnz.sum(axis=1).astype(jnp.int32)              # [nb]
        max_nnz = max(int(jnp.max(counts)), 1)
        sentinel = jnp.int32(n_blk)
        idx = jnp.where(blk_nnz,
                        jnp.arange(n_blk, dtype=jnp.int32)[None, :], sentinel)
        idx = jnp.sort(idx, axis=1)[:, :max_nnz]     # non-empty first, ascending
        last = jnp.take_along_axis(idx, jnp.maximum(counts - 1, 0)[:, None],
                                   axis=1)
        pos = jnp.arange(max_nnz, dtype=jnp.int32)[None, :]
        # pad ragged slots with the last valid tile index (dedups DMAs); the
        # kernel skips them via pl.when(ki < counts[qi]).
        col_ids = jnp.where(pos < counts[:, None], idx, last)
        col_ids = jnp.minimum(col_ids, n_blk - 1).astype(jnp.int32)

        # pad node rows to a tile multiple; padded rows have no edges and are
        # sliced off at the end, so they never contaminate real nodes.
        output = jnp.zeros((n_pad, x.shape[1]), jnp.float32).at[:n].set(
            x.astype(jnp.float32))

        for lp in self.layers:
            # F.dropout with training=False is the identity
            output = gat_layer(output, adj, col_ids, counts,
                               lp["w"], lp["albd"], lp["arbd"], lp["b"],
                               heads=lp["heads"], out_ch=lp["out_ch"],
                               concat=lp["concat"], act_name=lp["act"])
        return output[:n]


# ---------------------------------------------------------------------------
if __name__ == "__main__":
    key = jax.random.PRNGKey(0)

    # small GNN: 200 nodes (padded to 256 -> exercises a real 2x2 tile grid),
    # 32 input features, 2 layers
    N = 200
    NUM_FEAT = 32
    # architecture: [att_type, agg_type, act, head_num, out_channels] per layer
    architecture = ["gat", "sum", "elu", 2, 16,
                    "gat", "sum", "linear", 2, 16]

    net = GnnNetPallas(architecture, num_feat=NUM_FEAT, layer_num=2,
                       one_layer_component_num=5, dropout=0.6)
    key, kparams, kx = jax.random.split(key, 3)
    net.build_architecture(kparams)

    # deterministic inputs: node features + ring-graph edge_index (both dirs)
    x = jax.random.normal(kx, (N, NUM_FEAT), jnp.float32)
    ids = jnp.arange(N, dtype=jnp.int32)
    src = jnp.concatenate([ids, (ids + 1) % N])
    dst = jnp.concatenate([(ids + 1) % N, ids])
    edge_index_all = jnp.stack([src, dst], axis=0)   # [2, E]

    out = net.forward(x, edge_index_all)             # [N, 16]
    out = jax.block_until_ready(out)
    assert out.shape == (N, 16) and out.dtype == jnp.float32
    assert bool(jnp.all(jnp.isfinite(out)))
    print("KERNEL_OK")
</pallas_src>

<mosaic_0001>
module attributes {stable_mosaic.version = 11 : i64} {
  func.func @_proj_kernel(%arg0: i32, %arg1: memref<256x32xf32, #tpu.memory_space<vmem>>, %arg2: memref<32x32xf32, #tpu.memory_space<vmem>>, %arg3: memref<32x2xf32, #tpu.memory_space<vmem>>, %arg4: memref<32x2xf32, #tpu.memory_space<vmem>>, %arg5: memref<256x32xf32, #tpu.memory_space<vmem>>, %arg6: memref<256x2xf32, #tpu.memory_space<vmem>>, %arg7: memref<2x256xf32, #tpu.memory_space<vmem>>) attributes {dimension_semantics = [#tpu.dimension_semantics<parallel>], iteration_bounds = array<i64: 1>, scalar_prefetch = 0 : i64, scratch_operands = 0 : i64, tpu.core_type = #tpu.core_type<tc>, window_params = [{transform_indices = @transform_0, window_bounds = array<i64: 256, 32>}, {pipeline_mode = #tpu.pipeline_mode<synchronous>, transform_indices = @transform_1, window_bounds = array<i64: 32, 32>}, {pipeline_mode = #tpu.pipeline_mode<synchronous>, transform_indices = @transform_2, window_bounds = array<i64: 32, 2>}, {pipeline_mode = #tpu.pipeline_mode<synchronous>, transform_indices = @transform_3, window_bounds = array<i64: 32, 2>}, {transform_indices = @transform_4, window_bounds = array<i64: 256, 32>}, {transform_indices = @transform_5, window_bounds = array<i64: 256, 2>}, {transform_indices = @transform_6, window_bounds = array<i64: 2, 256>}]} {
    %c0 = arith.constant 0 : index
    %c0_0 = arith.constant 0 : index
    %0 = vector.load %arg1[%c0, %c0_0] : memref<256x32xf32, #tpu.memory_space<vmem>>, vector<256x32xf32>
    %c0_1 = arith.constant 0 : index
    %c0_2 = arith.constant 0 : index
    %1 = vector.load %arg2[%c0_1, %c0_2] : memref<32x32xf32, #tpu.memory_space<vmem>>, vector<32x32xf32>
    %cst = arith.constant dense<0.000000e+00> : vector<256x32xf32>
    %2 = tpu.matmul %0, %1, %cst {dimension_numbers = #tpu.dot_dimension_numbers<[1], [0], [0], [1], [0, 0, 1, 1], [], []>} : vector<256x32xf32>, vector<32x32xf32>, vector<256x32xf32> -> vector<256x32xf32>
    %c0_3 = arith.constant 0 : index
    %c0_4 = arith.constant 0 : index
    %3 = vector.load %arg5[%c0_3, %c0_4] : memref<256x32xf32, #tpu.memory_space<vmem>>, vector<256x32xf32>
    tpu.vector_store %arg5[%c0_3, %c0_4], %2 {strides = array<i32>} : memref<256x32xf32, #tpu.memory_space<vmem>>, vector<256x32xf32>,
    %c0_5 = arith.constant 0 : index
    %c0_6 = arith.constant 0 : index
    %4 = vector.load %arg3[%c0_5, %c0_6] : memref<32x2xf32, #tpu.memory_space<vmem>>, vector<32x2xf32>
    %cst_7 = arith.constant dense<0.000000e+00> : vector<256x2xf32>
    %5 = tpu.matmul %2, %4, %cst_7 {dimension_numbers = #tpu.dot_dimension_numbers<[1], [0], [0], [1], [0, 0, 1, 1], [], []>} : vector<256x32xf32>, vector<32x2xf32>, vector<256x2xf32> -> vector<256x2xf32>
    %c0_8 = arith.constant 0 : index
    %c0_9 = arith.constant 0 : index
    %6 = vector.load %arg6[%c0_8, %c0_9] : memref<256x2xf32, #tpu.memory_space<vmem>>, vector<256x2xf32>
    tpu.vector_store %arg6[%c0_8, %c0_9], %5 {strides = array<i32>} : memref<256x2xf32, #tpu.memory_space<vmem>>, vector<256x2xf32>,
    %c0_10 = arith.constant 0 : index
    %c0_11 = arith.constant 0 : index
    %7 = vector.load %arg4[%c0_10, %c0_11] : memref<32x2xf32, #tpu.memory_space<vmem>>, vector<32x2xf32>
    %cst_12 = arith.constant dense<0.000000e+00> : vector<256x2xf32>
    %8 = tpu.matmul %2, %7, %cst_12 {dimension_numbers = #tpu.dot_dimension_numbers<[1], [0], [0], [1], [0, 0, 1, 1], [], []>} : vector<256x32xf32>, vector<32x2xf32>, vector<256x2xf32> -> vector<256x2xf32>
    %9 = tpu.transpose %8, [1, 0] : vector<256x2xf32> -> vector<2x256xf32>
    %c0_13 = arith.constant 0 : index
    %c0_14 = arith.constant 0 : index
    %10 = vector.load %arg7[%c0_13, %c0_14] : memref<2x256xf32, #tpu.memory_space<vmem>>, vector<2x256xf32>
    tpu.vector_store %arg7[%c0_13, %c0_14], %9 {strides = array<i32>} : memref<2x256xf32, #tpu.memory_space<vmem>>, vector<2x256xf32>,
    return
  }
  func.func @transform_0(%arg0: i32) -> (i32, i32) {
    %c0_i32 = arith.constant 0 : i32
    %c0_i32_0 = arith.constant 0 : i32
    return %arg0, %c0_i32 : i32, i32
  }
  func.func @transform_1(%arg0: i32) -> (i32, i32) {
    %c0_i32 = arith.constant 0 : i32
    %c0_i32_0 = arith.constant 0 : i32
    %c0_i32_1 = arith.constant 0 : i32
    return %c0_i32, %c0_i32_0 : i32, i32
  }
  func.func @transform_2(%arg0: i32) -> (i32, i32) {
    %c0_i32 = arith.constant 0 : i32
    %c0_i32_0 = arith.constant 0 : i32
    %c0_i32_1 = arith.constant 0 : i32
    return %c0_i32, %c0_i32_0 : i32, i32
  }
  func.func @transform_3(%arg0: i32) -> (i32, i32) {
    %c0_i32 = arith.constant 0 : i32
    %c0_i32_0 = arith.constant 0 : i32
    %c0_i32_1 = arith.constant 0 : i32
    return %c0_i32, %c0_i32_0 : i32, i32
  }
  func.func @transform_4(%arg0: i32) -> (i32, i32) {
    %c0_i32 = arith.constant 0 : i32
    %c0_i32_0 = arith.constant 0 : i32
    return %arg0, %c0_i32 : i32, i32
  }
  func.func @transform_5(%arg0: i32) -> (i32, i32) {
    %c0_i32 = arith.constant 0 : i32
    %c0_i32_0 = arith.constant 0 : i32
    return %arg0, %c0_i32 : i32, i32
  }
  func.func @transform_6(%arg0: i32) -> (i32, i32) {
    %c0_i32 = arith.constant 0 : i32
    %c0_i32_0 = arith.constant 0 : i32
    return %c0_i32, %arg0 : i32, i32
  }
}

</mosaic_0001>

<llo_original>
// kernel: tpu_custom_call.1
$region0: #{tpu_custom_call.1}
  #allocation0 [shape = 'u32[]', space=smem, size = 0x4, offset = 0x4, fixed_abs, tag = 'smem constant byte address 0x4 - core index']
  #allocation1 [shape = 'u32[144,128]{1,0:T(1,128)}', space=vmem, size = 0x12000, scoped, tag = 'internal scratch']
  %s0 = inlined_call_operand.vmem [shape: f32[256,32], index: 0, kind: input, shape index: {}]
  %s1 = inlined_call_operand.vmem [shape: f32[32,32], index: 1, kind: input, shape index: {}]
  %s2 = inlined_call_operand.vmem [shape: f32[32,2], index: 2, kind: input, shape index: {}]
  %s3 = inlined_call_operand.vmem [shape: f32[32,2], index: 3, kind: input, shape index: {}]
  %s4 = inlined_call_operand.vmem [shape: f32[256,32], index: 4, kind: output, shape index: {0}]
  %s5 = inlined_call_operand.vmem [shape: f32[256,2], index: 5, kind: output, shape index: {1}]
  %s6 = inlined_call_operand.hbm [shape: f32[2,256], index: 6, kind: output, shape index: {2}]
  %7 = xla_tuple %s4, %s5, %s6
  %s8 = sld [smem:[#allocation0]]
  $region42: #{tpu_custom_call.1} parent=0
    _
  %s10 = ssub.s32 1, %s8
  %s11 = scalar_select 0, %s10, %s8
  $region1: #{tpu_custom_call.1} parent=0
    #allocation2 [shape = 'u8[2048]{0}', space=vmem, size = 0x800, scoped, tag = 'output window, operand 2, single buffered']
    #allocation3 [shape = 's32[1]{0}', space=sflag, size = 0x4, scoped, tag = 'scoped memory for tpu_custom_call.1']
    %12 = vsyncpa [#allocation3], 0
    // Predicated region
    $region2: #{tpu_custom_call.1} parent=1 // pred_check
      _
    $region3: #{tpu_custom_call.1} parent=1 // pred_check_branch
      %14 = sbr.rel (0) target = $region5
    $region4: #{tpu_custom_call.1} parent=1 // pred_region
      _
    $region5: #{tpu_custom_call.1} parent=1 // pred_fallthru
      _
    // Predicated region
    $region6: #{tpu_custom_call.1} parent=1 // pred_check
      _
    $region7: #{tpu_custom_call.1} parent=1 // pred_check_branch
      %16 = sbr.rel (0) target = $region9
    $region8: #{tpu_custom_call.1} parent=1 // pred_region
      _
    $region9: #{tpu_custom_call.1} parent=1 // pred_fallthru
      _
    // Predicated region
    $region10: #{tpu_custom_call.1} parent=1 // pred_check
      _
    $region11: #{tpu_custom_call.1} parent=1 // pred_check_branch
      %18 = sbr.rel (0) target = $region13
    $region12: #{tpu_custom_call.1} parent=1 // pred_region
      _
    $region13: #{tpu_custom_call.1} parent=1 // pred_fallthru
      _
    // Predicated region
    $region14: #{tpu_custom_call.1} parent=1 // pred_check
      _
    $region15: #{tpu_custom_call.1} parent=1 // pred_check_branch
      %20 = sbr.rel (0) target = $region17
    $region16: #{tpu_custom_call.1} parent=1 // pred_region
      _
    $region17: #{tpu_custom_call.1} parent=1 // pred_fallthru
      _
    %v21 = vld [vmem:[%s0] sm:$0xff]
    %v22 = vld [vmem:[%s0 + $0x8] sm:$0xff]
    %v23 = vld [vmem:[%s0 + $0x10] sm:$0xff]
    %v24 = vld [vmem:[%s0 + $0x18] sm:$0xff]
    %v25 = vld [vmem:[%s0 + $0x20] sm:$0xff]
    %v26 = vld [vmem:[%s0 + $0x28] sm:$0xff]
    %v27 = vld [vmem:[%s0 + $0x30] sm:$0xff]
    %v28 = vld [vmem:[%s0 + $0x38] sm:$0xff]
    %v29 = vld [vmem:[%s0 + $0x40] sm:$0xff]
    %v30 = vld [vmem:[%s0 + $0x48] sm:$0xff]
    %v31 = vld [vmem:[%s0 + $0x50] sm:$0xff]
    %v32 = vld [vmem:[%s0 + $0x58] sm:$0xff]
    %v33 = vld [vmem:[%s0 + $0x60] sm:$0xff]
    %v34 = vld [vmem:[%s0 + $0x68] sm:$0xff]
    %v35 = vld [vmem:[%s0 + $0x70] sm:$0xff]
    %v36 = vld [vmem:[%s0 + $0x78] sm:$0xff]
    %v37 = vld [vmem:[%s0 + $0x80] sm:$0xff]
    %v38 = vld [vmem:[%s0 + $0x88] sm:$0xff]
    %v39 = vld [vmem:[%s0 + $0x90] sm:$0xff]
    %v40 = vld [vmem:[%s0 + $0x98] sm:$0xff]
    %v41 = vld [vmem:[%s0 + $0xa0] sm:$0xff]
    %v42 = vld [vmem:[%s0 + $0xa8] sm:$0xff]
    %v43 = vld [vmem:[%s0 + $0xb0] sm:$0xff]
    %v44 = vld [vmem:[%s0 + $0xb8] sm:$0xff]
    %v45 = vld [vmem:[%s0 + $0xc0] sm:$0xff]
    %v46 = vld [vmem:[%s0 + $0xc8] sm:$0xff]
    %v47 = vld [vmem:[%s0 + $0xd0] sm:$0xff]
    %v48 = vld [vmem:[%s0 + $0xd8] sm:$0xff]
    %v49 = vld [vmem:[%s0 + $0xe0] sm:$0xff]
    %v50 = vld [vmem:[%s0 + $0xe8] sm:$0xff]
    %v51 = vld [vmem:[%s0 + $0xf0] sm:$0xff]
    %v52 = vld [vmem:[%s0 + $0xf8] sm:$0xff]
    %v53 = vld [vmem:[%s1] sm:$0xff]
    %v54 = vld [vmem:[%s1 + $0x8] sm:$0xff]
    %v55 = vld [vmem:[%s1 + $0x10] sm:$0xff]
    %v56 = vld [vmem:[%s1 + $0x18] sm:$0xff]
    %vm57 = vcmask 261120
    %v59 = vsel %vm57, %v21, 0
    %v62 = vsel %vm57, %v22, 0
    %v65 = vsel %vm57, %v23, 0
    %v68 = vsel %vm57, %v24, 0
    %v71 = vsel %vm57, %v25, 0
    %v74 = vsel %vm57, %v26, 0
    %v77 = vsel %vm57, %v27, 0
    %v80 = vsel %vm57, %v28, 0
    %v83 = vsel %vm57, %v29, 0
    %v86 = vsel %vm57, %v30, 0
    %v89 = vsel %vm57, %v31, 0
    %v92 = vsel %vm57, %v32, 0
    %v95 = vsel %vm57, %v33, 0
    %v98 = vsel %vm57, %v34, 0
    %v101 = vsel %vm57, %v35, 0
    %v104 = vsel %vm57, %v36, 0
    %v107 = vsel %vm57, %v37, 0
    %v110 = vsel %vm57, %v38, 0
    %v113 = vsel %vm57, %v39, 0
    %v116 = vsel %vm57, %v40, 0
    %v119 = vsel %vm57, %v41, 0
    %v122 = vsel %vm57, %v42, 0
    %v125 = vsel %vm57, %v43, 0
    %v128 = vsel %vm57, %v44, 0
    %v131 = vsel %vm57, %v45, 0
    %v134 = vsel %vm57, %v46, 0
    %v137 = vsel %vm57, %v47, 0
    %v140 = vsel %vm57, %v48, 0
    %v143 = vsel %vm57, %v49, 0
    %v146 = vsel %vm57, %v50, 0
    %v149 = vsel %vm57, %v51, 0
    %v152 = vsel %vm57, %v52, 0
    %154 = vmatprep.subr.mxu0 0.0
    %155 = vmatpush1.msra.mxu0 %v53
    %156 = vmatprep.subr.mxu0 0.0
    %157 = vmatpush1.msra.mxu0 %v54
    %158 = vmatprep.subr.mxu0 0.0
    %159 = vmatpush1.msra.mxu0 %v55
    %160 = vmatprep.subr.mxu0 0.0
    %161 = vmatpush1.msra.mxu0 %v56
    %162 = vmatprep.subr.mxu0 0.0
    %163 = vmatpush1.msra.mxu0 0.0
    %164 = vmatprep.subr.mxu0 0.0
    %165 = vmatpush1.msra.mxu0 0.0
    %166 = vmatprep.subr.mxu0 0.0
    %167 = vmatpush1.msra.mxu0 0.0
    %168 = vmatprep.subr.mxu0 0.0
    %169 = vmatpush1.msra.mxu0 0.0
    %170 = vmatprep.subr.mxu0 0.0
    %171 = vmatpush1.msra.mxu0 0.0
    %172 = vmatprep.subr.mxu0 0.0
    %173 = vmatpush1.msra.mxu0 0.0
    %174 = vmatprep.subr.mxu0 0.0
    %175 = vmatpush1.msra.mxu0 0.0
    %176 = vmatprep.subr.mxu0 0.0
    %177 = vmatpush1.msra.mxu0 0.0
    %178 = vmatprep.subr.mxu0 0.0
    %179 = vmatpush1.msra.mxu0 0.0
    %180 = vmatprep.subr.mxu0 0.0
    %181 = vmatpush1.msra.mxu0 0.0
    %182 = vmatprep.subr.mxu0 0.0
    %183 = vmatpush1.msra.mxu0 0.0
    %184 = vmatprep.subr.mxu0 0.0
    %185 = vmatpush1.msra.mxu0 0.0
    %186 = vmatprep.subr.mxu0 0.0
    %187 = vmatpush1.msra.mxu0 0.0
    %188 = vmatprep.subr.mxu0 0.0
    %189 = vmatpush1.msra.mxu0 0.0
    %190 = vmatprep.subr.mxu0 0.0
    %191 = vmatpush1.msra.mxu0 0.0
    %192 = vmatprep.subr.mxu0 0.0
    %193 = vmatpush1.msra.mxu0 0.0
    %194 = vmatprep.subr.mxu0 0.0
    %195 = vmatpush1.msra.mxu0 0.0
    %196 = vmatprep.subr.mxu0 0.0
    %197 = vmatpush1.msra.mxu0 0.0
    %198 = vmatprep.subr.mxu0 0.0
    %199 = vmatpush1.msra.mxu0 0.0
    %200 = vmatprep.subr.mxu0 0.0
    %201 = vmatpush1.msra.mxu0 0.0
    %202 = vmatprep.subr.mxu0 0.0
    %203 = vmatpush1.msra.mxu0 0.0
    %204 = vmatprep.subr.mxu0 0.0
    %205 = vmatpush1.msra.mxu0 0.0
    %206 = vmatprep.subr.mxu0 0.0
    %207 = vmatpush1.msra.mxu0 0.0
    %208 = vmatprep.subr.mxu0 0.0
    %209 = vmatpush1.msra.mxu0 0.0
    %210 = vmatprep.subr.mxu0 0.0
    %211 = vmatpush1.msra.mxu0 0.0
    %212 = vmatprep.subr.mxu0 0.0
    %213 = vmatpush1.msra.mxu0 0.0
    %214 = vmatprep.subr.mxu0 0.0
    %215 = vmatpush1.msra.mxu0 0.0
    %216 = vmatprep.subr.mxu0 0.0
    %217 = vmatpush1.msra.mxu0 0.0
    %218 = vmatprep.mubr.f32.mxu0 0.0
    %219 = vmatmul.mubr.f32.gmra.mrb[0].mxu0 %v59
    %v220 = vpop.f32.mrb[0].mxu0
    %v221 = vadd.f32 0.0, %v220
    %v222 = vpop.f32.mrb[0].mxu0
    %223 = vmatprep.mubr.f32.mxu0 0.0
    %224 = vmatmul.mubr.f32.gmra.mrb[0].mxu0 %v62
    %v225 = vpop.f32.mrb[0].mxu0
    %v226 = vadd.f32 0.0, %v225
    %v227 = vpop.f32.mrb[0].mxu0
    %228 = vmatprep.mubr.f32.mxu0 0.0
    %229 = vmatmul.mubr.f32.gmra.mrb[0].mxu0 %v65
    %v230 = vpop.f32.mrb[0].mxu0
    %v231 = vadd.f32 0.0, %v230
    %v232 = vpop.f32.mrb[0].mxu0
    %233 = vmatprep.mubr.f32.mxu0 0.0
    %234 = vmatmul.mubr.f32.gmra.mrb[0].mxu0 %v68
    %v235 = vpop.f32.mrb[0].mxu0
    %v236 = vadd.f32 0.0, %v235
    %v237 = vpop.f32.mrb[0].mxu0
    %238 = vmatprep.mubr.f32.mxu0 0.0
    %239 = vmatmul.mubr.f32.gmra.mrb[0].mxu0 %v71
    %v240 = vpop.f32.mrb[0].mxu0
    %v241 = vadd.f32 0.0, %v240
    %v242 = vpop.f32.mrb[0].mxu0
    %243 = vmatprep.mubr.f32.mxu0 0.0
    %244 = vmatmul.mubr.f32.gmra.mrb[0].mxu0 %v74
    %v245 = vpop.f32.mrb[0].mxu0
    %v246 = vadd.f32 0.0, %v245
    %v247 = vpop.f32.mrb[0].mxu0
    %248 = vmatprep.mubr.f32.mxu0 0.0
    %249 = vmatmul.mubr.f32.gmra.mrb[0].mxu0 %v77
    %v250 = vpop.f32.mrb[0].mxu0
    %v251 = vadd.f32 0.0, %v250
    %v252 = vpop.f32.mrb[0].mxu0
    %253 = vmatprep.mubr.f32.mxu0 0.0
    %254 = vmatmul.mubr.f32.gmra.mrb[0].mxu0 %v80
    %v255 = vpop.f32.mrb[0].mxu0
    %v256 = vadd.f32 0.0, %v255
    %v257 = vpop.f32.mrb[0].mxu0
    %258 = vmatprep.mubr.f32.mxu0 0.0
    %259 = vmatmul.mubr.f32.gmra.mrb[0].mxu0 %v83
    %v260 = vpop.f32.mrb[0].mxu0
    %v261 = vadd.f32 0.0, %v260
    %v262 = vpop.f32.mrb[0].mxu0
    %263 = vmatprep.mubr.f32.mxu0 0.0
    %264 = vmatmul.mubr.f32.gmra.mrb[0].mxu0 %v86
    %v265 = vpop.f32.mrb[0].mxu0
    %v266 = vadd.f32 0.0, %v265
    %v267 = vpop.f32.mrb[0].mxu0
    %268 = vmatprep.mubr.f32.mxu0 0.0
    %269 = vmatmul.mubr.f32.gmra.mrb[0].mxu0 %v89
    %v270 = vpop.f32.mrb[0].mxu0
    %v271 = vadd.f32 0.0, %v270
    %v272 = vpop.f32.mrb[0].mxu0
    %273 = vmatprep.mubr.f32.mxu0 0.0
    %274 = vmatmul.mubr.f32.gmra.mrb[0].mxu0 %v92
    %v275 = vpop.f32.mrb[0].mxu0
    %v276 = vadd.f32 0.0, %v275
    %v277 = vpop.f32.mrb[0].mxu0
    %278 = vmatprep.mubr.f32.mxu0 0.0
    %279 = vmatmul.mubr.f32.gmra.mrb[0].mxu0 %v95
    %v280 = vpop.f32.mrb[0].mxu0
    %v281 = vadd.f32 0.0, %v280
    %v282 = vpop.f32.mrb[0].mxu0
    %283 = vmatprep.mubr.f32.mxu0 0.0
    %284 = vmatmul.mubr.f32.gmra.mrb[0].mxu0 %v98
    %v285 = vpop.f32.mrb[0].mxu0
    %v286 = vadd.f32 0.0, %v285
    %v287 = vpop.f32.mrb[0].mxu0
    %288 = vmatprep.mubr.f32.mxu0 0.0
    %289 = vmatmul.mubr.f32.gmra.mrb[0].mxu0 %v101
    %v290 = vpop.f32.mrb[0].mxu0
    %v291 = vadd.f32 0.0, %v290
    %v292 = vpop.f32.mrb[0].mxu0
    %293 = vmatprep.mubr.f32.mxu0 0.0
    %294 = vmatmul.mubr.f32.gmra.mrb[0].mxu0 %v104
    %v295 = vpop.f32.mrb[0].mxu0
    %v296 = vadd.f32 0.0, %v295
    %v297 = vpop.f32.mrb[0].mxu0
    %298 = vmatprep.mubr.f32.mxu0 0.0
    %299 = vmatmul.mubr.f32.gmra.mrb[0].mxu0 %v107
    %v300 = vpop.f32.mrb[0].mxu0
    %v301 = vadd.f32 0.0, %v300
    %v302 = vpop.f32.mrb[0].mxu0
    %303 = vmatprep.mubr.f32.mxu0 0.0
    %304 = vmatmul.mubr.f32.gmra.mrb[0].mxu0 %v110
    %v305 = vpop.f32.mrb[0].mxu0
    %v306 = vadd.f32 0.0, %v305
    %v307 = vpop.f32.mrb[0].mxu0
    %308 = vmatprep.mubr.f32.mxu0 0.0
    %309 = vmatmul.mubr.f32.gmra.mrb[0].mxu0 %v113
    %v310 = vpop.f32.mrb[0].mxu0
    %v311 = vadd.f32 0.0, %v310
    %v312 = vpop.f32.mrb[0].mxu0
    %313 = vmatprep.mubr.f32.mxu0 0.0
    %314 = vmatmul.mubr.f32.gmra.mrb[0].mxu0 %v116
    %v315 = vpop.f32.mrb[0].mxu0
    %v316 = vadd.f32 0.0, %v315
    %v317 = vpop.f32.mrb[0].mxu0
    %318 = vmatprep.mubr.f32.mxu0 0.0
    %319 = vmatmul.mubr.f32.gmra.mrb[0].mxu0 %v119
    %v320 = vpop.f32.mrb[0].mxu0
    %v321 = vadd.f32 0.0, %v320
    %v322 = vpop.f32.mrb[0].mxu0
    %323 = vmatprep.mubr.f32.mxu0 0.0
    %324 = vmatmul.mubr.f32.gmra.mrb[0].mxu0 %v122
    %v325 = vpop.f32.mrb[0].mxu0
    %v326 = vadd.f32 0.0, %v325
    %v327 = vpop.f32.mrb[0].mxu0
    %328 = vmatprep.mubr.f32.mxu0 0.0
    %329 = vmatmul.mubr.f32.gmra.mrb[0].mxu0 %v125
    %v330 = vpop.f32.mrb[0].mxu0
    %v331 = vadd.f32 0.0, %v330
    %v332 = vpop.f32.mrb[0].mxu0
    %333 = vmatprep.mubr.f32.mxu0 0.0
    %334 = vmatmul.mubr.f32.gmra.mrb[0].mxu0 %v128
    %v335 = vpop.f32.mrb[0].mxu0
    %v336 = vadd.f32 0.0, %v335
    %v337 = vpop.f32.mrb[0].mxu0
    %338 = vmatprep.mubr.f32.mxu0 0.0
    %339 = vmatmul.mubr.f32.gmra.mrb[0].mxu0 %v131
    %v340 = vpop.f32.mrb[0].mxu0
    %v341 = vadd.f32 0.0, %v340
    %v342 = vpop.f32.mrb[0].mxu0
    %343 = vmatprep.mubr.f32.mxu0 0.0
    %344 = vmatmul.mubr.f32.gmra.mrb[0].mxu0 %v134
    %v345 = vpop.f32.mrb[0].mxu0
    %v346 = vadd.f32 0.0, %v345
    %v347 = vpop.f32.mrb[0].mxu0
    %348 = vmatprep.mubr.f32.mxu0 0.0
    %349 = vmatmul.mubr.f32.gmra.mrb[0].mxu0 %v137
    %v350 = vpop.f32.mrb[0].mxu0
    %v351 = vadd.f32 0.0, %v350
    %v352 = vpop.f32.mrb[0].mxu0
    %353 = vmatprep.mubr.f32.mxu0 0.0
    %354 = vmatmul.mubr.f32.gmra.mrb[0].mxu0 %v140
    %v355 = vpop.f32.mrb[0].mxu0
    %v356 = vadd.f32 0.0, %v355
    %v357 = vpop.f32.mrb[0].mxu0
    %358 = vmatprep.mubr.f32.mxu0 0.0
    %359 = vmatmul.mubr.f32.gmra.mrb[0].mxu0 %v143
    %v360 = vpop.f32.mrb[0].mxu0
    %v361 = vadd.f32 0.0, %v360
    %v362 = vpop.f32.mrb[0].mxu0
    %363 = vmatprep.mubr.f32.mxu0 0.0
    %364 = vmatmul.mubr.f32.gmra.mrb[0].mxu0 %v146
    %v365 = vpop.f32.mrb[0].mxu0
    %v366 = vadd.f32 0.0, %v365
    %v367 = vpop.f32.mrb[0].mxu0
    %368 = vmatprep.mubr.f32.mxu0 0.0
    %369 = vmatmul.mubr.f32.gmra.mrb[0].mxu0 %v149
    %v370 = vpop.f32.mrb[0].mxu0
    %v371 = vadd.f32 0.0, %v370
    %v372 = vpop.f32.mrb[0].mxu0
    %373 = vmatprep.mubr.f32.mxu0 0.0
    %374 = vmatmul.mubr.f32.gmra.mrb[0].mxu0 %v152
    %v375 = vpop.f32.mrb[0].mxu0
    %v376 = vadd.f32 0.0, %v375
    %v377 = vpop.f32.mrb[0].mxu0
    %378 = vdwg.mxu0
    %379 = vst.msk [vmem:[%s4] sm:$0xff] %vm57, %v221
    %380 = vst.msk [vmem:[%s4 + $0x8] sm:$0xff] %vm57, %v226
    %381 = vst.msk [vmem:[%s4 + $0x10] sm:$0xff] %vm57, %v231
    %382 = vst.msk [vmem:[%s4 + $0x18] sm:$0xff] %vm57, %v236
    %383 = vst.msk [vmem:[%s4 + $0x20] sm:$0xff] %vm57, %v241
    %384 = vst.msk [vmem:[%s4 + $0x28] sm:$0xff] %vm57, %v246
    %385 = vst.msk [vmem:[%s4 + $0x30] sm:$0xff] %vm57, %v251
    %386 = vst.msk [vmem:[%s4 + $0x38] sm:$0xff] %vm57, %v256
    %387 = vst.msk [vmem:[%s4 + $0x40] sm:$0xff] %vm57, %v261
    %388 = vst.msk [vmem:[%s4 + $0x48] sm:$0xff] %vm57, %v266
    %389 = vst.msk [vmem:[%s4 + $0x50] sm:$0xff] %vm57, %v271
    %390 = vst.msk [vmem:[%s4 + $0x58] sm:$0xff] %vm57, %v276
    %391 = vst.msk [vmem:[%s4 + $0x60] sm:$0xff] %vm57, %v281
    %392 = vst.msk [vmem:[%s4 + $0x68] sm:$0xff] %vm57, %v286
    %393 = vst.msk [vmem:[%s4 + $0x70] sm:$0xff] %vm57, %v291
    %394 = vst.msk [vmem:[%s4 + $0x78] sm:$0xff] %vm57, %v296
    %395 = vst.msk [vmem:[%s4 + $0x80] sm:$0xff] %vm57, %v301
    %396 = vst.msk [vmem:[%s4 + $0x88] sm:$0xff] %vm57, %v306
    %397 = vst.msk [vmem:[%s4 + $0x90] sm:$0xff] %vm57, %v311
    %398 = vst.msk [vmem:[%s4 + $0x98] sm:$0xff] %vm57, %v316
    %399 = vst.msk [vmem:[%s4 + $0xa0] sm:$0xff] %vm57, %v321
    %400 = vst.msk [vmem:[%s4 + $0xa8] sm:$0xff] %vm57, %v326
    %401 = vst.msk [vmem:[%s4 + $0xb0] sm:$0xff] %vm57, %v331
    %402 = vst.msk [vmem:[%s4 + $0xb8] sm:$0xff] %vm57, %v336
    %403 = vst.msk [vmem:[%s4 + $0xc0] sm:$0xff] %vm57, %v341
    %404 = vst.msk [vmem:[%s4 + $0xc8] sm:$0xff] %vm57, %v346
    %405 = vst.msk [vmem:[%s4 + $0xd0] sm:$0xff] %vm57, %v351
    %406 = vst.msk [vmem:[%s4 + $0xd8] sm:$0xff] %vm57, %v356
    %407 = vst.msk [vmem:[%s4 + $0xe0] sm:$0xff] %vm57, %v361
    %408 = vst.msk [vmem:[%s4 + $0xe8] sm:$0xff] %vm57, %v366
    %409 = vst.msk [vmem:[%s4 + $0xf0] sm:$0xff] %vm57, %v371
    %410 = vst.msk [vmem:[%s4 + $0xf8] sm:$0xff] %vm57, %v376
    %v411 = vld [vmem:[%s2] sm:$0xff]
    %v412 = vld [vmem:[%s2 + $0x8] sm:$0xff]
    %v413 = vld [vmem:[%s2 + $0x10] sm:$0xff]
    %v414 = vld [vmem:[%s2 + $0x18] sm:$0xff]
    %v416 = vsel %vm57, %v221, 0
    %v419 = vsel %vm57, %v226, 0
    %v422 = vsel %vm57, %v231, 0
    %v425 = vsel %vm57, %v236, 0
    %v428 = vsel %vm57, %v241, 0
    %v431 = vsel %vm57, %v246, 0
    %v434 = vsel %vm57, %v251, 0
    %v437 = vsel %vm57, %v256, 0
    %v440 = vsel %vm57, %v261, 0
    %v443 = vsel %vm57, %v266, 0
    %v446 = vsel %vm57, %v271, 0
    %v449 = vsel %vm57, %v276, 0
    %v452 = vsel %vm57, %v281, 0
    %v455 = vsel %vm57, %v286, 0
    %v458 = vsel %vm57, %v291, 0
    %v461 = vsel %vm57, %v296, 0
    %v464 = vsel %vm57, %v301, 0
    %v467 = vsel %vm57, %v306, 0
    %v470 = vsel %vm57, %v311, 0
    %v473 = vsel %vm57, %v316, 0
    %v476 = vsel %vm57, %v321, 0
    %v479 = vsel %vm57, %v326, 0
    %v482 = vsel %vm57, %v331, 0
    %v485 = vsel %vm57, %v336, 0
    %v488 = vsel %vm57, %v341, 0
    %v491 = vsel %vm57, %v346, 0
    %v494 = vsel %vm57, %v351, 0
    %v497 = vsel %vm57, %v356, 0
    %v500 = vsel %vm57, %v361, 0
    %v503 = vsel %vm57, %v366, 0
    %v506 = vsel %vm57, %v371, 0
    %v509 = vsel %vm57, %v376, 0
    %511 = vmatprep.subr.mxu0 0.0
    %512 = vmatpush1.msra.mxu0 %v411
    %513 = vmatprep.subr.mxu0 0.0
    %514 = vmatpush1.msra.mxu0 %v412
    %515 = vmatprep.subr.mxu0 0.0
    %516 = vmatpush1.msra.mxu0 %v413
    %517 = vmatprep.subr.mxu0 0.0
    %518 = vmatpush1.msra.mxu0 %v414
    %519 = vmatprep.subr.mxu0 0.0
    %520 = vmatpush1.msra.mxu0 0.0
    %521 = vmatprep.subr.mxu0 0.0
    %522 = vmatpush1.msra.mxu0 0.0
    %523 = vmatprep.subr.mxu0 0.0
    %524 = vmatpush1.msra.mxu0 0.0
    %525 = vmatprep.subr.mxu0 0.0
    %526 = vmatpush1.msra.mxu0 0.0
    %527 = vmatprep.subr.mxu0 0.0
    %528 = vmatpush1.msra.mxu0 0.0
    %529 = vmatprep.subr.mxu0 0.0
    %530 = vmatpush1.msra.mxu0 0.0
    %531 = vmatprep.subr.mxu0 0.0
    %532 = vmatpush1.msra.mxu0 0.0
    %533 = vmatprep.subr.mxu0 0.0
    %534 = vmatpush1.msra.mxu0 0.0
    %535 = vmatprep.subr.mxu0 0.0
    %536 = vmatpush1.msra.mxu0 0.0
    %537 = vmatprep.subr.mxu0 0.0
    %538 = vmatpush1.msra.mxu0 0.0
    %539 = vmatprep.subr.mxu0 0.0
    %540 = vmatpush1.msra.mxu0 0.0
    %541 = vmatprep.subr.mxu0 0.0
    %542 = vmatpush1.msra.mxu0 0.0
    %543 = vmatprep.subr.mxu0 0.0
    %544 = vmatpush1.msra.mxu0 0.0
    %545 = vmatprep.subr.mxu0 0.0
    %546 = vmatpush1.msra.mxu0 0.0
    %547 = vmatprep.subr.mxu0 0.0
    %548 = vmatpush1.msra.mxu0 0.0
    %549 = vmatprep.subr.mxu0 0.0
    %550 = vmatpush1.msra.mxu0 0.0
    %551 = vmatprep.subr.mxu0 0.0
    %552 = vmatpush1.msra.mxu0 0.0
    %553 = vmatprep.subr.mxu0 0.0
    %554 = vmatpush1.msra.mxu0 0.0
    %555 = vmatprep.subr.mxu0 0.0
    %556 = vmatpush1.msra.mxu0 0.0
    %557 = vmatprep.subr.mxu0 0.0
    %558 = vmatpush1.msra.mxu0 0.0
    %559 = vmatprep.subr.mxu0 0.0
    %560 = vmatpush1.msra.mxu0 0.0
    %561 = vmatprep.subr.mxu0 0.0
    %562 = vmatpush1.msra.mxu0 0.0
    %563 = vmatprep.subr.mxu0 0.0
    %564 = vmatpush1.msra.mxu0 0.0
    %565 = vmatprep.subr.mxu0 0.0
    %566 = vmatpush1.msra.mxu0 0.0
    %567 = vmatprep.subr.mxu0 0.0
    %568 = vmatpush1.msra.mxu0 0.0
    %569 = vmatprep.subr.mxu0 0.0
    %570 = vmatpush1.msra.mxu0 0.0
    %571 = vmatprep.subr.mxu0 0.0
    %572 = vmatpush1.msra.mxu0 0.0
    %573 = vmatprep.subr.mxu0 0.0
    %574 = vmatpush1.msra.mxu0 0.0
    %575 = vmatprep.mubr.f32.mxu0 0.0
    %576 = vmatmul.mubr.f32.gmra.mrb[0].mxu0 %v416
    %v577 = vpop.f32.mrb[0].mxu0
    %v578 = vadd.f32 0.0, %v577
    %v579 = vpop.f32.mrb[0].mxu0
    %580 = vmatprep.mubr.f32.mxu0 0.0
    %581 = vmatmul.mubr.f32.gmra.mrb[0].mxu0 %v419
    %v582 = vpop.f32.mrb[0].mxu0
    %v583 = vadd.f32 0.0, %v582
    %v584 = vpop.f32.mrb[0].mxu0
    %585 = vmatprep.mubr.f32.mxu0 0.0
    %586 = vmatmul.mubr.f32.gmra.mrb[0].mxu0 %v422
    %v587 = vpop.f32.mrb[0].mxu0
    %v588 = vadd.f32 0.0, %v587
    %v589 = vpop.f32.mrb[0].mxu0
    %590 = vmatprep.mubr.f32.mxu0 0.0
    %591 = vmatmul.mubr.f32.gmra.mrb[0].mxu0 %v425
    %v592 = vpop.f32.mrb[0].mxu0
    %v593 = vadd.f32 0.0, %v592
    %v594 = vpop.f32.mrb[0].mxu0
    %595 = vmatprep.mubr.f32.mxu0 0.0
    %596 = vmatmul.mubr.f32.gmra.mrb[0].mxu0 %v428
    %v597 = vpop.f32.mrb[0].mxu0
    %v598 = vadd.f32 0.0, %v597
    %v599 = vpop.f32.mrb[0].mxu0
    %600 = vmatprep.mubr.f32.mxu0 0.0
    %601 = vmatmul.mubr.f32.gmra.mrb[0].mxu0 %v431
    %v602 = vpop.f32.mrb[0].mxu0
    %v603 = vadd.f32 0.0, %v602
    %v604 = vpop.f32.mrb[0].mxu0
    %605 = vmatprep.mubr.f32.mxu0 0.0
    %606 = vmatmul.mubr.f32.gmra.mrb[0].mxu0 %v434
    %v607 = vpop.f32.mrb[0].mxu0
    %v608 = vadd.f32 0.0, %v607
    %v609 = vpop.f32.mrb[0].mxu0
    %610 = vmatprep.mubr.f32.mxu0 0.0
    %611 = vmatmul.mubr.f32.gmra.mrb[0].mxu0 %v437
    %v612 = vpop.f32.mrb[0].mxu0
    %v613 = vadd.f32 0.0, %v612
    %v614 = vpop.f32.mrb[0].mxu0
    %615 = vmatprep.mubr.f32.mxu0 0.0
    %616 = vmatmul.mubr.f32.gmra.mrb[0].mxu0 %v440
    %v617 = vpop.f32.mrb[0].mxu0
    %v618 = vadd.f32 0.0, %v617
    %v619 = vpop.f32.mrb[0].mxu0
    %620 = vmatprep.mubr.f32.mxu0 0.0
    %621 = vmatmul.mubr.f32.gmra.mrb[0].mxu0 %v443
    %v622 = vpop.f32.mrb[0].mxu0
    %v623 = vadd.f32 0.0, %v622
    %v624 = vpop.f32.mrb[0].mxu0
    %625 = vmatprep.mubr.f32.mxu0 0.0
    %626 = vmatmul.mubr.f32.gmra.mrb[0].mxu0 %v446
    %v627 = vpop.f32.mrb[0].mxu0
    %v628 = vadd.f32 0.0, %v627
    %v629 = vpop.f32.mrb[0].mxu0
    %630 = vmatprep.mubr.f32.mxu0 0.0
    %631 = vmatmul.mubr.f32.gmra.mrb[0].mxu0 %v449
    %v632 = vpop.f32.mrb[0].mxu0
    %v633 = vadd.f32 0.0, %v632
    %v634 = vpop.f32.mrb[0].mxu0
    %635 = vmatprep.mubr.f32.mxu0 0.0
    %636 = vmatmul.mubr.f32.gmra.mrb[0].mxu0 %v452
    %v637 = vpop.f32.mrb[0].mxu0
    %v638 = vadd.f32 0.0, %v637
    %v639 = vpop.f32.mrb[0].mxu0
    %640 = vmatprep.mubr.f32.mxu0 0.0
    %641 = vmatmul.mubr.f32.gmra.mrb[0].mxu0 %v455
    %v642 = vpop.f32.mrb[0].mxu0
    %v643 = vadd.f32 0.0, %v642
    %v644 = vpop.f32.mrb[0].mxu0
    %645 = vmatprep.mubr.f32.mxu0 0.0
    %646 = vmatmul.mubr.f32.gmra.mrb[0].mxu0 %v458
    %v647 = vpop.f32.mrb[0].mxu0
    %v648 = vadd.f32 0.0, %v647
    %v649 = vpop.f32.mrb[0].mxu0
    %650 = vmatprep.mubr.f32.mxu0 0.0
    %651 = vmatmul.mubr.f32.gmra.mrb[0].mxu0 %v461
    %v652 = vpop.f32.mrb[0].mxu0
    %v653 = vadd.f32 0.0, %v652
    %v654 = vpop.f32.mrb[0].mxu0
    %655 = vmatprep.mubr.f32.mxu0 0.0
    %656 = vmatmul.mubr.f32.gmra.mrb[0].mxu0 %v464
    %v657 = vpop.f32.mrb[0].mxu0
    %v658 = vadd.f32 0.0, %v657
    %v659 = vpop.f32.mrb[0].mxu0
    %660 = vmatprep.mubr.f32.mxu0 0.0
    %661 = vmatmul.mubr.f32.gmra.mrb[0].mxu0 %v467
    %v662 = vpop.f32.mrb[0].mxu0
    %v663 = vadd.f32 0.0, %v662
    %v664 = vpop.f32.mrb[0].mxu0
    %665 = vmatprep.mubr.f32.mxu0 0.0
    %666 = vmatmul.mubr.f32.gmra.mrb[0].mxu0 %v470
    %v667 = vpop.f32.mrb[0].mxu0
    %v668 = vadd.f32 0.0, %v667
    %v669 = vpop.f32.mrb[0].mxu0
    %670 = vmatprep.mubr.f32.mxu0 0.0
    %671 = vmatmul.mubr.f32.gmra.mrb[0].mxu0 %v473
    %v672 = vpop.f32.mrb[0].mxu0
    %v673 = vadd.f32 0.0, %v672
    %v674 = vpop.f32.mrb[0].mxu0
    %675 = vmatprep.mubr.f32.mxu0 0.0
    %676 = vmatmul.mubr.f32.gmra.mrb[0].mxu0 %v476
    %v677 = vpop.f32.mrb[0].mxu0
    %v678 = vadd.f32 0.0, %v677
    %v679 = vpop.f32.mrb[0].mxu0
    %680 = vmatprep.mubr.f32.mxu0 0.0
    %681 = vmatmul.mubr.f32.gmra.mrb[0].mxu0 %v479
    %v682 = vpop.f32.mrb[0].mxu0
    %v683 = vadd.f32 0.0, %v682
    %v684 = vpop.f32.mrb[0].mxu0
    %685 = vmatprep.mubr.f32.mxu0 0.0
    %686 = vmatmul.mubr.f32.gmra.mrb[0].mxu0 %v482
    %v687 = vpop.f32.mrb[0].mxu0
    %v688 = vadd.f32 0.0, %v687
    %v689 = vpop.f32.mrb[0].mxu0
    %690 = vmatprep.mubr.f32.mxu0 0.0
    %691 = vmatmul.mubr.f32.gmra.mrb[0].mxu0 %v485
    %v692 = vpop.f32.mrb[0].mxu0
    %v693 = vadd.f32 0.0, %v692
    %v694 = vpop.f32.mrb[0].mxu0
    %695 = vmatprep.mubr.f32.mxu0 0.0
    %696 = vmatmul.mubr.f32.gmra.mrb[0].mxu0 %v488
    %v697 = vpop.f32.mrb[0].mxu0
    %v698 = vadd.f32 0.0, %v697
    %v699 = vpop.f32.mrb[0].mxu0
    %700 = vmatprep.mubr.f32.mxu0 0.0
    %701 = vmatmul.mubr.f32.gmra.mrb[0].mxu0 %v491
    %v702 = vpop.f32.mrb[0].mxu0
    %v703 = vadd.f32 0.0, %v702
    %v704 = vpop.f32.mrb[0].mxu0
    %705 = vmatprep.mubr.f32.mxu0 0.0
    %706 = vmatmul.mubr.f32.gmra.mrb[0].mxu0 %v494
    %v707 = vpop.f32.mrb[0].mxu0
    %v708 = vadd.f32 0.0, %v707
    %v709 = vpop.f32.mrb[0].mxu0
    %710 = vmatprep.mubr.f32.mxu0 0.0
    %711 = vmatmul.mubr.f32.gmra.mrb[0].mxu0 %v497
    %v712 = vpop.f32.mrb[0].mxu0
    %v713 = vadd.f32 0.0, %v712
    %v714 = vpop.f32.mrb[0].mxu0
    %715 = vmatprep.mubr.f32.mxu0 0.0
    %716 = vmatmul.mubr.f32.gmra.mrb[0].mxu0 %v500
    %v717 = vpop.f32.mrb[0].mxu0
    %v718 = vadd.f32 0.0, %v717
    %v719 = vpop.f32.mrb[0].mxu0
    %720 = vmatprep.mubr.f32.mxu0 0.0
    %721 = vmatmul.mubr.f32.gmra.mrb[0].mxu0 %v503
    %v722 = vpop.f32.mrb[0].mxu0
    %v723 = vadd.f32 0.0, %v722
    %v724 = vpop.f32.mrb[0].mxu0
    %725 = vmatprep.mubr.f32.mxu0 0.0
    %726 = vmatmul.mubr.f32.gmra.mrb[0].mxu0 %v506
    %v727 = vpop.f32.mrb[0].mxu0
    %v728 = vadd.f32 0.0, %v727
    %v729 = vpop.f32.mrb[0].mxu0
    %730 = vmatprep.mubr.f32.mxu0 0.0
    %731 = vmatmul.mubr.f32.gmra.mrb[0].mxu0 %v509
    %v732 = vpop.f32.mrb[0].mxu0
    %v733 = vadd.f32 0.0, %v732
    %v734 = vpop.f32.mrb[0].mxu0
    %735 = vdwg.mxu0
    %vm736 = vcmask 15360
    %737 = vst.msk [vmem:[%s5] sm:$0xff] %vm736, %v578
    %738 = vst.msk [vmem:[%s5 + $0x8] sm:$0xff] %vm736, %v583
    %739 = vst.msk [vmem:[%s5 + $0x10] sm:$0xff] %vm736, %v588
    %740 = vst.msk [vmem:[%s5 + $0x18] sm:$0xff] %vm736, %v593
    %741 = vst.msk [vmem:[%s5 + $0x20] sm:$0xff] %vm736, %v598
    %742 = vst.msk [vmem:[%s5 + $0x28] sm:$0xff] %vm736, %v603
    %743 = vst.msk [vmem:[%s5 + $0x30] sm:$0xff] %vm736, %v608
    %744 = vst.msk [vmem:[%s5 + $0x38] sm:$0xff] %vm736, %v613
    %745 = vst.msk [vmem:[%s5 + $0x40] sm:$0xff] %vm736, %v618
    %746 = vst.msk [vmem:[%s5 + $0x48] sm:$0xff] %vm736, %v623
    %747 = vst.msk [vmem:[%s5 + $0x50] sm:$0xff] %vm736, %v628
    %748 = vst.msk [vmem:[%s5 + $0x58] sm:$0xff] %vm736, %v633
    %749 = vst.msk [vmem:[%s5 + $0x60] sm:$0xff] %vm736, %v638
    %750 = vst.msk [vmem:[%s5 + $0x68] sm:$0xff] %vm736, %v643
    %751 = vst.msk [vmem:[%s5 + $0x70] sm:$0xff] %vm736, %v648
    %752 = vst.msk [vmem:[%s5 + $0x78] sm:$0xff] %vm736, %v653
    %753 = vst.msk [vmem:[%s5 + $0x80] sm:$0xff] %vm736, %v658
    %754 = vst.msk [vmem:[%s5 + $0x88] sm:$0xff] %vm736, %v663
    %755 = vst.msk [vmem:[%s5 + $0x90] sm:$0xff] %vm736, %v668
    %756 = vst.msk [vmem:[%s5 + $0x98] sm:$0xff] %vm736, %v673
    %757 = vst.msk [vmem:[%s5 + $0xa0] sm:$0xff] %vm736, %v678
    %758 = vst.msk [vmem:[%s5 + $0xa8] sm:$0xff] %vm736, %v683
    %759 = vst.msk [vmem:[%s5 + $0xb0] sm:$0xff] %vm736, %v688
    %760 = vst.msk [vmem:[%s5 + $0xb8] sm:$0xff] %vm736, %v693
    %761 = vst.msk [vmem:[%s5 + $0xc0] sm:$0xff] %vm736, %v698
    %762 = vst.msk [vmem:[%s5 + $0xc8] sm:$0xff] %vm736, %v703
    %763 = vst.msk [vmem:[%s5 + $0xd0] sm:$0xff] %vm736, %v708
    %764 = vst.msk [vmem:[%s5 + $0xd8] sm:$0xff] %vm736, %v713
    %765 = vst.msk [vmem:[%s5 + $0xe0] sm:$0xff] %vm736, %v718
    %766 = vst.msk [vmem:[%s5 + $0xe8] sm:$0xff] %vm736, %v723
    %767 = vst.msk [vmem:[%s5 + $0xf0] sm:$0xff] %vm736, %v728
    %768 = vst.msk [vmem:[%s5 + $0xf8] sm:$0xff] %vm736, %v733
    %v769 = vld [vmem:[%s3] sm:$0xff]
    %v770 = vld [vmem:[%s3 + $0x8] sm:$0xff]
    %v771 = vld [vmem:[%s3 + $0x10] sm:$0xff]
    %v772 = vld [vmem:[%s3 + $0x18] sm:$0xff]
    %773 = vmatprep.subr.mxu0 0.0
    %774 = vmatpush1.msra.mxu0 %v769
    %775 = vmatprep.subr.mxu0 0.0
    %776 = vmatpush1.msra.mxu0 %v770
    %777 = vmatprep.subr.mxu0 0.0
    %778 = vmatpush1.msra.mxu0 %v771
    %779 = vmatprep.subr.mxu0 0.0
    %780 = vmatpush1.msra.mxu0 %v772
    %781 = vmatprep.subr.mxu0 0.0
    %782 = vmatpush1.msra.mxu0 0.0
    %783 = vmatprep.subr.mxu0 0.0
    %784 = vmatpush1.msra.mxu0 0.0
    %785 = vmatprep.subr.mxu0 0.0
    %786 = vmatpush1.msra.mxu0 0.0
    %787 = vmatprep.subr.mxu0 0.0
    %788 = vmatpush1.msra.mxu0 0.0
    %789 = vmatprep.subr.mxu0 0.0
    %790 = vmatpush1.msra.mxu0 0.0
    %791 = vmatprep.subr.mxu0 0.0
    %792 = vmatpush1.msra.mxu0 0.0
    %793 = vmatprep.subr.mxu0 0.0
    %794 = vmatpush1.msra.mxu0 0.0
    %795 = vmatprep.subr.mxu0 0.0
    %796 = vmatpush1.msra.mxu0 0.0
    %797 = vmatprep.subr.mxu0 0.0
    %798 = vmatpush1.msra.mxu0 0.0
    %799 = vmatprep.subr.mxu0 0.0
    %800 = vmatpush1.msra.mxu0 0.0
    %801 = vmatprep.subr.mxu0 0.0
    %802 = vmatpush1.msra.mxu0 0.0
    %803 = vmatprep.subr.mxu0 0.0
    %804 = vmatpush1.msra.mxu0 0.0
    %805 = vmatprep.subr.mxu0 0.0
    %806 = vmatpush1.msra.mxu0 0.0
    %807 = vmatprep.subr.mxu0 0.0
    %808 = vmatpush1.msra.mxu0 0.0
    %809 = vmatprep.subr.mxu0 0.0
    %810 = vmatpush1.msra.mxu0 0.0
    %811 = vmatprep.subr.mxu0 0.0
    %812 = vmatpush1.msra.mxu0 0.0
    %813 = vmatprep.subr.mxu0 0.0
    %814 = vmatpush1.msra.mxu0 0.0
    %815 = vmatprep.subr.mxu0 0.0
    %816 = vmatpush1.msra.mxu0 0.0
    %817 = vmatprep.subr.mxu0 0.0
    %818 = vmatpush1.msra.mxu0 0.0
    %819 = vmatprep.subr.mxu0 0.0
    %820 = vmatpush1.msra.mxu0 0.0
    %821 = vmatprep.subr.mxu0 0.0
    %822 = vmatpush1.msra.mxu0 0.0
    %823 = vmatprep.subr.mxu0 0.0
    %824 = vmatpush1.msra.mxu0 0.0
    %825 = vmatprep.subr.mxu0 0.0
    %826 = vmatpush1.msra.mxu0 0.0
    %827 = vmatprep.subr.mxu0 0.0
    %828 = vmatpush1.msra.mxu0 0.0
    %829 = vmatprep.subr.mxu0 0.0
    %830 = vmatpush1.msra.mxu0 0.0
    %831 = vmatprep.subr.mxu0 0.0
    %832 = vmatpush1.msra.mxu0 0.0
    %833 = vmatprep.subr.mxu0 0.0
    %834 = vmatpush1.msra.mxu0 0.0
    %835 = vmatprep.subr.mxu0 0.0
    %836 = vmatpush1.msra.mxu0 0.0
    %837 = vmatprep.mubr.f32.mxu0 0.0
    %838 = vmatmul.mubr.f32.gmra.mrb[0].mxu0 %v416
    %v839 = vpop.f32.mrb[0].mxu0
    %v840 = vadd.f32 0.0, %v839
    %v841 = vpop.f32.mrb[0].mxu0
    %842 = vmatprep.mubr.f32.mxu0 0.0
    %843 = vmatmul.mubr.f32.gmra.mrb[0].mxu0 %v419
    %v844 = vpop.f32.mrb[0].mxu0
    %v845 = vadd.f32 0.0, %v844
    %v846 = vpop.f32.mrb[0].mxu0
    %847 = vmatprep.mubr.f32.mxu0 0.0
    %848 = vmatmul.mubr.f32.gmra.mrb[0].mxu0 %v422
    %v849 = vpop.f32.mrb[0].mxu0
    %v850 = vadd.f32 0.0, %v849
    %v851 = vpop.f32.mrb[0].mxu0
    %852 = vmatprep.mubr.f32.mxu0 0.0
    %853 = vmatmul.mubr.f32.gmra.mrb[0].mxu0 %v425
    %v854 = vpop.f32.mrb[0].mxu0
    %v855 = vadd.f32 0.0, %v854
    %v856 = vpop.f32.mrb[0].mxu0
    %857 = vmatprep.mubr.f32.mxu0 0.0
    %858 = vmatmul.mubr.f32.gmra.mrb[0].mxu0 %v428
    %v859 = vpop.f32.mrb[0].mxu0
    %v860 = vadd.f32 0.0, %v859
    %v861 = vpop.f32.mrb[0].mxu0
    %862 = vmatprep.mubr.f32.mxu0 0.0
    %863 = vmatmul.mubr.f32.gmra.mrb[0].mxu0 %v431
    %v864 = vpop.f32.mrb[0].mxu0
    %v865 = vadd.f32 0.0, %v864
    %v866 = vpop.f32.mrb[0].mxu0
    %867 = vmatprep.mubr.f32.mxu0 0.0
    %868 = vmatmul.mubr.f32.gmra.mrb[0].mxu0 %v434
    %v869 = vpop.f32.mrb[0].mxu0
    %v870 = vadd.f32 0.0, %v869
    %v871 = vpop.f32.mrb[0].mxu0
    %872 = vmatprep.mubr.f32.mxu0 0.0
    %873 = vmatmul.mubr.f32.gmra.mrb[0].mxu0 %v437
    %v874 = vpop.f32.mrb[0].mxu0
    %v875 = vadd.f32 0.0, %v874
    %v876 = vpop.f32.mrb[0].mxu0
    %877 = vmatprep.mubr.f32.mxu0 0.0
    %878 = vmatmul.mubr.f32.gmra.mrb[0].mxu0 %v440
    %v879 = vpop.f32.mrb[0].mxu0
    %v880 = vadd.f32 0.0, %v879
    %v881 = vpop.f32.mrb[0].mxu0
    %882 = vmatprep.mubr.f32.mxu0 0.0
    %883 = vmatmul.mubr.f32.gmra.mrb[0].mxu0 %v443
    %v884 = vpop.f32.mrb[0].mxu0
    %v885 = vadd.f32 0.0, %v884
    %v886 = vpop.f32.mrb[0].mxu0
    %887 = vmatprep.mubr.f32.mxu0 0.0
    %888 = vmatmul.mubr.f32.gmra.mrb[0].mxu0 %v446
    %v889 = vpop.f32.mrb[0].mxu0
    %v890 = vadd.f32 0.0, %v889
    %v891 = vpop.f32.mrb[0].mxu0
    %892 = vmatprep.mubr.f32.mxu0 0.0
    %893 = vmatmul.mubr.f32.gmra.mrb[0].mxu0 %v449
    %v894 = vpop.f32.mrb[0].mxu0
    %v895 = vadd.f32 0.0, %v894
    %v896 = vpop.f32.mrb[0].mxu0
    %897 = vmatprep.mubr.f32.mxu0 0.0
    %898 = vmatmul.mubr.f32.gmra.mrb[0].mxu0 %v452
    %v899 = vpop.f32.mrb[0].mxu0
    %v900 = vadd.f32 0.0, %v899
    %v901 = vpop.f32.mrb[0].mxu0
    %902 = vmatprep.mubr.f32.mxu0 0.0
    %903 = vmatmul.mubr.f32.gmra.mrb[0].mxu0 %v455
    %v904 = vpop.f32.mrb[0].mxu0
    %v905 = vadd.f32 0.0, %v904
    %v906 = vpop.f32.mrb[0].mxu0
    %907 = vmatprep.mubr.f32.mxu0 0.0
    %908 = vmatmul.mubr.f32.gmra.mrb[0].mxu0 %v458
    %v909 = vpop.f32.mrb[0].mxu0
    %v910 = vadd.f32 0.0, %v909
    %v911 = vpop.f32.mrb[0].mxu0
    %912 = vmatprep.mubr.f32.mxu0 0.0
    %913 = vmatmul.mubr.f32.gmra.mrb[0].mxu0 %v461
    %v914 = vpop.f32.mrb[0].mxu0
    %v915 = vadd.f32 0.0, %v914
    %v916 = vpop.f32.mrb[0].mxu0
    %917 = vmatprep.mubr.f32.mxu0 0.0
    %918 = vmatmul.mubr.f32.gmra.mrb[0].mxu0 %v464
    %v919 = vpop.f32.mrb[0].mxu0
    %v920 = vadd.f32 0.0, %v919
    %v921 = vpop.f32.mrb[0].mxu0
    %922 = vmatprep.mubr.f32.mxu0 0.0
    %923 = vmatmul.mubr.f32.gmra.mrb[0].mxu0 %v467
    %v924 = vpop.f32.mrb[0].mxu0
    %v925 = vadd.f32 0.0, %v924
    %v926 = vpop.f32.mrb[0].mxu0
    %927 = vmatprep.mubr.f32.mxu0 0.0
    %928 = vmatmul.mubr.f32.gmra.mrb[0].mxu0 %v470
    %v929 = vpop.f32.mrb[0].mxu0
    %v930 = vadd.f32 0.0, %v929
    %v931 = vpop.f32.mrb[0].mxu0
    %932 = vmatprep.mubr.f32.mxu0 0.0
    %933 = vmatmul.mubr.f32.gmra.mrb[0].mxu0 %v473
    %v934 = vpop.f32.mrb[0].mxu0
    %v935 = vadd.f32 0.0, %v934
    %v936 = vpop.f32.mrb[0].mxu0
    %937 = vmatprep.mubr.f32.mxu0 0.0
    %938 = vmatmul.mubr.f32.gmra.mrb[0].mxu0 %v476
    %v939 = vpop.f32.mrb[0].mxu0
    %v940 = vadd.f32 0.0, %v939
    %v941 = vpop.f32.mrb[0].mxu0
    %942 = vmatprep.mubr.f32.mxu0 0.0
    %943 = vmatmul.mubr.f32.gmra.mrb[0].mxu0 %v479
    %v944 = vpop.f32.mrb[0].mxu0
    %v945 = vadd.f32 0.0, %v944
    %v946 = vpop.f32.mrb[0].mxu0
    %947 = vmatprep.mubr.f32.mxu0 0.0
    %948 = vmatmul.mubr.f32.gmra.mrb[0].mxu0 %v482
    %v949 = vpop.f32.mrb[0].mxu0
    %v950 = vadd.f32 0.0, %v949
    %v951 = vpop.f32.mrb[0].mxu0
    %952 = vmatprep.mubr.f32.mxu0 0.0
    %953 = vmatmul.mubr.f32.gmra.mrb[0].mxu0 %v485
    %v954 = vpop.f32.mrb[0].mxu0
    %v955 = vadd.f32 0.0, %v954
    %v956 = vpop.f32.mrb[0].mxu0
    %957 = vmatprep.mubr.f32.mxu0 0.0
    %958 = vmatmul.mubr.f32.gmra.mrb[0].mxu0 %v488
    %v959 = vpop.f32.mrb[0].mxu0
    %v960 = vadd.f32 0.0, %v959
    %v961 = vpop.f32.mrb[0].mxu0
    %962 = vmatprep.mubr.f32.mxu0 0.0
    %963 = vmatmul.mubr.f32.gmra.mrb[0].mxu0 %v491
    %v964 = vpop.f32.mrb[0].mxu0
    %v965 = vadd.f32 0.0, %v964
    %v966 = vpop.f32.mrb[0].mxu0
    %967 = vmatprep.mubr.f32.mxu0 0.0
    %968 = vmatmul.mubr.f32.gmra.mrb[0].mxu0 %v494
    %v969 = vpop.f32.mrb[0].mxu0
    %v970 = vadd.f32 0.0, %v969
    %v971 = vpop.f32.mrb[0].mxu0
    %972 = vmatprep.mubr.f32.mxu0 0.0
    %973 = vmatmul.mubr.f32.gmra.mrb[0].mxu0 %v497
    %v974 = vpop.f32.mrb[0].mxu0
    %v975 = vadd.f32 0.0, %v974
    %v976 = vpop.f32.mrb[0].mxu0
    %977 = vmatprep.mubr.f32.mxu0 0.0
    %978 = vmatmul.mubr.f32.gmra.mrb[0].mxu0 %v500
    %v979 = vpop.f32.mrb[0].mxu0
    %v980 = vadd.f32 0.0, %v979
    %v981 = vpop.f32.mrb[0].mxu0
    %982 = vmatprep.mubr.f32.mxu0 0.0
    %983 = vmatmul.mubr.f32.gmra.mrb[0].mxu0 %v503
    %v984 = vpop.f32.mrb[0].mxu0
    %v985 = vadd.f32 0.0, %v984
    %v986 = vpop.f32.mrb[0].mxu0
    %987 = vmatprep.mubr.f32.mxu0 0.0
    %988 = vmatmul.mubr.f32.gmra.mrb[0].mxu0 %v506
    %v989 = vpop.f32.mrb[0].mxu0
    %v990 = vadd.f32 0.0, %v989
    %v991 = vpop.f32.mrb[0].mxu0
    %992 = vmatprep.mubr.f32.mxu0 0.0
    %993 = vmatmul.mubr.f32.gmra.mrb[0].mxu0 %v509
    %v994 = vpop.f32.mrb[0].mxu0
    %v995 = vadd.f32 0.0, %v994
    %v996 = vpop.f32.mrb[0].mxu0
    %997 = vdwg.mxu0
    %998 = vxpose.xlu0.b32.start [1/16] %v840, 128
    %999 = vxpose.xlu0.b32.cont [2/16] %v845, 128
    %1000 = vxpose.xlu0.b32.cont [3/16] %v850, 128
    %1001 = vxpose.xlu0.b32.cont [4/16] %v855, 128
    %1002 = vxpose.xlu0.b32.cont [5/16] %v860, 128
    %1003 = vxpose.xlu0.b32.cont [6/16] %v865, 128
    %1004 = vxpose.xlu0.b32.cont [7/16] %v870, 128
    %1005 = vxpose.xlu0.b32.cont [8/16] %v875, 128
    %1006 = vxpose.xlu0.b32.cont [9/16] %v880, 128
    %1007 = vxpose.xlu0.b32.cont [10/16] %v885, 128
    %1008 = vxpose.xlu0.b32.cont [11/16] %v890, 128
    %1009 = vxpose.xlu0.b32.cont [12/16] %v895, 128
    %1010 = vxpose.xlu0.b32.cont [13/16] %v900, 128
    %1011 = vxpose.xlu0.b32.cont [14/16] %v905, 128
    %1012 = vxpose.xlu0.b32.cont [15/16] %v910, 128
    %1013 = vxpose.xlu0.b32.end [16/16] %v915, 128
    %v1014 = vpop.trf.xlu0
    %v1015 = vpop.trf.xlu0
    %v1016 = vpop.trf.xlu0
    %v1017 = vpop.trf.xlu0
    %v1018 = vpop.trf.xlu0
    %v1019 = vpop.trf.xlu0
    %v1020 = vpop.trf.xlu0
    %v1021 = vpop.trf.xlu0
    %v1022 = vpop.trf.xlu0
    %v1023 = vpop.trf.xlu0
    %v1024 = vpop.trf.xlu0
    %v1025 = vpop.trf.xlu0
    %v1026 = vpop.trf.xlu0
    %v1027 = vpop.trf.xlu0
    %v1028 = vpop.trf.xlu0
    %v1029 = vpop.trf.xlu0
    %1030 = vxpose.xlu0.b32.start [1/16] %v920, 128
    %1031 = vxpose.xlu0.b32.cont [2/16] %v925, 128
    %1032 = vxpose.xlu0.b32.cont [3/16] %v930, 128
    %1033 = vxpose.xlu0.b32.cont [4/16] %v935, 128
    %1034 = vxpose.xlu0.b32.cont [5/16] %v940, 128
    %1035 = vxpose.xlu0.b32.cont [6/16] %v945, 128
    %1036 = vxpose.xlu0.b32.cont [7/16] %v950, 128
    %1037 = vxpose.xlu0.b32.cont [8/16] %v955, 128
    %1038 = vxpose.xlu0.b32.cont [9/16] %v960, 128
    %1039 = vxpose.xlu0.b32.cont [10/16] %v965, 128
    %1040 = vxpose.xlu0.b32.cont [11/16] %v970, 128
    %1041 = vxpose.xlu0.b32.cont [12/16] %v975, 128
    %1042 = vxpose.xlu0.b32.cont [13/16] %v980, 128
    %1043 = vxpose.xlu0.b32.cont [14/16] %v985, 128
    %1044 = vxpose.xlu0.b32.cont [15/16] %v990, 128
    %1045 = vxpose.xlu0.b32.end [16/16] %v995, 128
    %v1046 = vpop.trf.xlu0
    %v1047 = vpop.trf.xlu0
    %v1048 = vpop.trf.xlu0
    %v1049 = vpop.trf.xlu0
    %v1050 = vpop.trf.xlu0
    %v1051 = vpop.trf.xlu0
    %v1052 = vpop.trf.xlu0
    %v1053 = vpop.trf.xlu0
    %v1054 = vpop.trf.xlu0
    %v1055 = vpop.trf.xlu0
    %v1056 = vpop.trf.xlu0
    %v1057 = vpop.trf.xlu0
    %v1058 = vpop.trf.xlu0
    %v1059 = vpop.trf.xlu0
    %v1060 = vpop.trf.xlu0
    %v1061 = vpop.trf.xlu0
    %v1064 = vcombine.low %v1014, %v1046
    %v1066 = vunpack.c.l.s4 1983009808
    %v1067 = vunpack.c.0.s8 %v1066
    %v1068 = vlaneseq
    %v1069 = vshrl.u32 %v1068, 7
    %v1070 = vsub.s32 %v1067, %v1069
    %v1071 = vrot.slane %v1064, %v1070
    %1073 = vst [vmem:[#allocation2] sm:$0xf] %v1071
    // Predicated region
    $region18: #{tpu_custom_call.1} parent=1 // pred_check
      _
    $region19: #{tpu_custom_call.1} parent=1 // pred_check_branch
      %1075 = sbr.rel (0) target = $region21
    $region20: #{tpu_custom_call.1} parent=1 // pred_region
      _
    $region21: #{tpu_custom_call.1} parent=1 // pred_fallthru
      _
    // Predicated region
    $region22: #{tpu_custom_call.1} parent=1 // pred_check
      _
    $region23: #{tpu_custom_call.1} parent=1 // pred_check_branch
      %1077 = sbr.rel (0) target = $region25
    $region24: #{tpu_custom_call.1} parent=1 // pred_region
      _
    $region25: #{tpu_custom_call.1} parent=1 // pred_fallthru
      _
    // Predicated region
    $region26: #{tpu_custom_call.1} parent=1 // pred_check
      _
    $region27: #{tpu_custom_call.1} parent=1 // pred_check_branch
      %1079 = sbr.rel (0) target = $region29
    $region28: #{tpu_custom_call.1} parent=1 // pred_region
      %s1081 = ssub.s32 64, 64
      %1082 = vsyncadd [#allocation3], %s1081
      %s1084 = sshll.u32 [#allocation2], 4
      %s1085 = int_to_ptr.vmem [resolvable:$true] %s1084
      %1087 = dma.vmem_to_hbm [thread:$0]  %s1085, 64, %s6, [#allocation3]
    $region29: #{tpu_custom_call.1} parent=1 // pred_fallthru
      _
    // Predicated region
    $region30: #{tpu_custom_call.1} parent=1 // pred_check
      _
    $region31: #{tpu_custom_call.1} parent=1 // pred_check_branch
      %1089 = sbr.rel (0) target = $region33
    $region32: #{tpu_custom_call.1} parent=1 // pred_region
      _
    $region33: #{tpu_custom_call.1} parent=1 // pred_fallthru
      _
    // Predicated region
    $region34: #{tpu_custom_call.1} parent=1 // pred_check
      _
    $region35: #{tpu_custom_call.1} parent=1 // pred_check_branch
      %1091 = sbr.rel (0) target = $region37
    $region36: #{tpu_custom_call.1} parent=1 // pred_region
      _
    $region37: #{tpu_custom_call.1} parent=1 // pred_fallthru
      _
    // Predicated region
    $region38: #{tpu_custom_call.1} parent=1 // pred_check
      _
    $region39: #{tpu_custom_call.1} parent=1 // pred_check_branch
      %1093 = sbr.rel (0) target = $region41
    $region40: #{tpu_custom_call.1} parent=1 // pred_region
      %1094 = dma.done [#allocation3], 64
    $region41: #{tpu_custom_call.1} parent=1 // pred_fallthru
      _
    %1095 = vsyncpa [#allocation3], 1

</llo_original>
